<compile_context>
chip_gen: v7x
topology: tpu7x:2x2x1
jax: 0.10.0
libtpu: 0.0.40
codegen_flags: <defaults>
</compile_context>

<pallas_src>
import functools
import math

import jax
import jax.numpy as jnp
from jax import lax
from jax.experimental import pallas as pl
from jax.experimental.pallas import tpu as pltpu

_LN_EPS = 1e-5  # torch.nn.LayerNorm default


# ----------------------------- helpers --------------------------------------

def _row_tile(m, target=256):
    """Largest row tile <= target that divides m and is a multiple of 8.
    Falls back to the whole axis (block == full dim is exempt from (8,128))."""
    if m <= target:
        return m
    t = (min(target, m) // 8) * 8
    while t >= 8:
        if m % t == 0:
            return t
        t -= 8
    return m


def _layernorm(z, g, b):
    mu = jnp.mean(z, axis=-1, keepdims=True)
    var = jnp.mean((z - mu) ** 2, axis=-1, keepdims=True)
    return (z - mu) * lax.rsqrt(var + _LN_EPS) * g + b


# ----------------------------- Pallas kernels -------------------------------

def _enc_kernel(x_ref, w_ref, b_ref, p_ref, o_ref):
    # self.enc: Linear(5D -> D) + ReLU, fused with positional-embedding add.
    # x:(1,ts,5D)  w:(5D,D)  b:(1,D)  pos:(ts,D)  ->  o:(1,ts,D)
    y = jnp.dot(x_ref[0], w_ref[...], preferred_element_type=jnp.float32)
    y = jnp.maximum(y + b_ref[...], 0.0)
    o_ref[0] = (y + p_ref[...]).astype(o_ref.dtype)


def pallas_enc(h, w, b, pos):
    B, Sp, K = h.shape
    D = w.shape[1]
    ts = _row_tile(Sp, 256)
    return pl.pallas_call(
        _enc_kernel,
        out_shape=jax.ShapeDtypeStruct((B, Sp, D), jnp.float32),
        grid=(B, Sp // ts),
        in_specs=[pl.BlockSpec((1, ts, K), lambda bb, j: (bb, j, 0)),
                  pl.BlockSpec((K, D), lambda bb, j: (0, 0)),
                  pl.BlockSpec((1, D), lambda bb, j: (0, 0)),
                  pl.BlockSpec((ts, D), lambda bb, j: (j, 0))],
        out_specs=pl.BlockSpec((1, ts, D), lambda bb, j: (bb, j, 0)),
        compiler_params=pltpu.CompilerParams(
            dimension_semantics=("parallel", "parallel")),
    )(h, w, b.reshape(1, D), pos)


def _encoder_layer_kernel(x_ref, wqkv_ref, bqkv_ref, wo_ref, bo_ref,
                          g1_ref, be1_ref, w1_ref, b1_ref, w2_ref, b2_ref,
                          g2_ref, be2_ref, o_ref, *, H, scale):
    # One full post-norm encoder layer for one batch element, entirely in VMEM:
    #   qkv = x @ Wqkv + bqkv ; per-head softmax(QK^T*scale)V ;
    #   z   = LN1(x + concat(heads) @ Wo + bo)
    #   out = LN2(z + W2 relu(W1 z + b1) + b2)
    x = x_ref[0]                                        # (Sp, D)
    Sp, D = x.shape
    dh = D // H

    # ---- multi-head self-attention ----
    qkv = jnp.dot(x, wqkv_ref[...],
                  preferred_element_type=jnp.float32) + bqkv_ref[...]   # (Sp,3D)
    q_all = qkv[:, :D] * scale                          # scale q once, not scores
    acc = jnp.zeros((Sp, D), jnp.float32)
    for hh in range(H):                                 # static unroll over heads
        qh = q_all[:, hh * dh:(hh + 1) * dh]
        kh = qkv[:, D + hh * dh:D + (hh + 1) * dh]
        vh = qkv[:, 2 * D + hh * dh:2 * D + (hh + 1) * dh]
        s = lax.dot_general(qh, kh, (((1,), (1,)), ((), ())),
                            preferred_element_type=jnp.float32)         # (Sp,Sp)
        m = jnp.max(s, axis=-1, keepdims=True)
        p = jnp.exp(s - m)
        p = p * pl.reciprocal(jnp.sum(p, axis=-1, keepdims=True), approx=True)
        ah = jnp.dot(p, vh, preferred_element_type=jnp.float32)         # (Sp,dh)
        # concat(heads) @ Wo == sum_h head_h @ Wo[h*dh:(h+1)*dh, :]
        acc = acc + jnp.dot(ah, wo_ref[hh * dh:(hh + 1) * dh, :],
                            preferred_element_type=jnp.float32)

    z = _layernorm(x + acc + bo_ref[...], g1_ref[...], be1_ref[...])     # (Sp,D)

    # ---- FFN (activations never leave VMEM) ----
    f = jnp.maximum(jnp.dot(z, w1_ref[...],
                            preferred_element_type=jnp.float32) + b1_ref[...], 0.0)
    y = z + jnp.dot(f, w2_ref[...],
                    preferred_element_type=jnp.float32) + b2_ref[...]
    o_ref[0] = _layernorm(y, g2_ref[...], be2_ref[...]).astype(o_ref.dtype)


def pallas_encoder_layer(h, lyr, H, scale):
    # TODO(synk): flash-style KV tiling for long aggregated sequences; the full
    #             (Sp, Sp) score block is currently materialized per head.
    B, Sp, D = h.shape
    F = lyr['w1'].shape[1]
    xspec = pl.BlockSpec((1, Sp, D), lambda bb: (bb, 0, 0))
    return pl.pallas_call(
        functools.partial(_encoder_layer_kernel, H=H, scale=scale),
        out_shape=jax.ShapeDtypeStruct((B, Sp, D), jnp.float32),
        grid=(B,),
        in_specs=[xspec,
                  pl.BlockSpec((D, 3 * D), lambda bb: (0, 0)),
                  pl.BlockSpec((1, 3 * D), lambda bb: (0, 0)),
                  pl.BlockSpec((D, D), lambda bb: (0, 0)),
                  pl.BlockSpec((1, D), lambda bb: (0, 0)),
                  pl.BlockSpec((1, D), lambda bb: (0, 0)),
                  pl.BlockSpec((1, D), lambda bb: (0, 0)),
                  pl.BlockSpec((D, F), lambda bb: (0, 0)),
                  pl.BlockSpec((1, F), lambda bb: (0, 0)),
                  pl.BlockSpec((F, D), lambda bb: (0, 0)),
                  pl.BlockSpec((1, D), lambda bb: (0, 0)),
                  pl.BlockSpec((1, D), lambda bb: (0, 0)),
                  pl.BlockSpec((1, D), lambda bb: (0, 0))],
        out_specs=xspec,
        compiler_params=pltpu.CompilerParams(dimension_semantics=("parallel",)),
    )(h,
      lyr['wqkv'], lyr['bqkv'].reshape(1, 3 * D),
      lyr['wo'], lyr['bo'].reshape(1, D),
      lyr['ln1_g'], lyr['ln1_b'],
      lyr['w1'], lyr['b1'].reshape(1, F),
      lyr['w2'], lyr['b2'].reshape(1, D),
      lyr['ln2_g'], lyr['ln2_b'])


def _dec_head_kernel(x_ref, wd_ref, bd_ref, g_ref, b_ref, wh_ref, o_ref, *, X):
    # self.dec (Linear D->5D + ReLU) fused with self.head (LayerNorm + Linear
    # D->Cpad, bias=False).  dec weights arrive pre-split per attribute chunk
    # (X, D, D) so every in-kernel weight index is a cheap leading-axis view
    # (no lane-unaligned slicing).  Output rows stay grouped as (tm, X*Cpad)
    # so the store slab is lane-dense (multiple of 128); the
    # 'b s (x d) -> b (s x) d' rearrange becomes a free row-major reshape in
    # the wrapper.
    x = x_ref[...]                                      # (tm, D)
    Cpad = wh_ref.shape[1]
    for xi in range(X):                                 # static unroll over x=5
        hx = jnp.maximum(jnp.dot(x, wd_ref[xi],
                                 preferred_element_type=jnp.float32)
                         + bd_ref[xi], 0.0)             # (tm, D)
        hn = _layernorm(hx, g_ref[...], b_ref[...])
        o_ref[:, xi * Cpad:(xi + 1) * Cpad] = jnp.dot(
            hn, wh_ref[...], preferred_element_type=jnp.float32)


def pallas_dec_head(x, wd, bd, g, beta, wh_pad, X=5):
    M, D = x.shape
    Cpad = wh_pad.shape[1]
    tm = _row_tile(M, 256)
    # Pre-split dec weights per attribute chunk: (D, X*D) -> (X, D, D).
    wd3 = jnp.transpose(wd.reshape(D, X, D), (1, 0, 2))
    bd3 = bd.reshape(X, 1, D)
    return pl.pallas_call(
        functools.partial(_dec_head_kernel, X=X),
        out_shape=jax.ShapeDtypeStruct((M, X * Cpad), jnp.float32),
        grid=(M // tm,),
        in_specs=[pl.BlockSpec((tm, D), lambda i: (i, 0)),
                  pl.BlockSpec((X, D, D), lambda i: (0, 0, 0)),
                  pl.BlockSpec((X, 1, D), lambda i: (0, 0, 0)),
                  pl.BlockSpec((1, D), lambda i: (0, 0)),
                  pl.BlockSpec((1, D), lambda i: (0, 0)),
                  pl.BlockSpec((D, Cpad), lambda i: (0, 0))],
        out_specs=pl.BlockSpec((tm, X * Cpad), lambda i: (i, 0)),
        compiler_params=pltpu.CompilerParams(dimension_semantics=("parallel",)),
    )(x, wd3, bd3, g, beta, wh_pad)


# ----------------------------- parameters -----------------------------------

def init_params(key, *, num_classes, dim_model, max_token_length,
                n_layers, n_heads, ffn_dim):
    D = dim_model
    n_agg = max_token_length // 5
    C = num_classes
    Cpad = ((C + 127) // 128) * 128          # lane-dense head output
    ks = iter(jax.random.split(key, 7 + 8 * n_layers))

    def mat(shape, scale=0.05):
        return jax.random.normal(next(ks), shape, jnp.float32) * scale

    head_w = mat((D, C))
    head_w_pad = jnp.zeros((D, Cpad), jnp.float32).at[:, :C].set(head_w)

    params = {
        'dim_model': D,
        'n_heads': n_heads,
        'num_classes': C,
        'cat_emb': mat((C, D), 0.1),
        'pos_emb': mat((n_agg, D), 0.1),
        'enc_w': mat((5 * D, D)), 'enc_b': mat((D,)),
        'dec_w': mat((D, 5 * D)), 'dec_b': mat((5 * D,)),
        'head_g': jnp.ones((1, D), jnp.float32),
        'head_b': jnp.zeros((1, D), jnp.float32),
        'head_w_pad': head_w_pad,
        'layers': [],
    }
    for _ in range(n_layers):
        params['layers'].append({
            'wqkv': mat((D, 3 * D)), 'bqkv': mat((3 * D,)),   # fused Q/K/V proj
            'wo': mat((D, D)), 'bo': mat((D,)),
            'ln1_g': jnp.ones((1, D), jnp.float32),
            'ln1_b': jnp.zeros((1, D), jnp.float32),
            'w1': mat((D, ffn_dim)), 'b1': mat((ffn_dim,)),
            'w2': mat((ffn_dim, D)), 'b2': mat((D,)),
            'ln2_g': jnp.ones((1, D), jnp.float32),
            'ln2_b': jnp.zeros((1, D), jnp.float32),
        })
    return params


# ----------------------------- forward ---------------------------------------

def categorical_aggregated_transformer_forward(params, seq):
    """seq: (B, S) int32, S divisible by 5.  Returns {'logits': (B, S, C)}."""
    B, S = seq.shape
    D = params['dim_model']
    C = params['num_classes']
    X = 5
    Sp = S // X
    H = params['n_heads']
    scale = 1.0 / math.sqrt(D // H)

    # TODO(synk): cat_emb embedding gather stays in plain XLA (no clean fused
    #             Pallas gather here); dropout(0.1) is identity in eval mode.
    h = params['cat_emb'][seq]                           # (B, S, D)
    h = h.reshape(B, Sp, X * D)                          # 'b (s x) d -> b s (x d)'

    # enc(Linear 5D->D + ReLU) + positional embedding add          [Pallas]
    h = pallas_enc(h, params['enc_w'], params['enc_b'],
                   params['pos_emb'][:Sp])               # (B, Sp, D)

    # backbone: post-norm transformer encoder, ONE fused kernel/layer [Pallas]
    for lyr in params['layers']:
        h = pallas_encoder_layer(h, lyr, H, scale)

    # dec(Linear D->5D + ReLU) + rearrange + head(LN + Linear)      [Pallas]
    out = pallas_dec_head(h.reshape(B * Sp, D), params['dec_w'], params['dec_b'],
                          params['head_g'], params['head_b'],
                          params['head_w_pad'], X=X)     # (B*Sp, X*Cpad)
    Cpad = params['head_w_pad'].shape[1]
    logits = out.reshape(B * S, Cpad)[:, :C].reshape(B, S, C)
    return {'logits': logits}


# ----------------------------- main -------------------------------------------

if __name__ == "__main__":
    key = jax.random.PRNGKey(0)
    k_params, k_seq = jax.random.split(key)

    num_classes = 16
    dim_model = 32
    max_token_length = 20       # -> aggregated max length 4
    B, S = 2, 20                # S divisible by 5
    n_layers, n_heads, ffn_dim = 2, 4, 64

    params = init_params(k_params,
                         num_classes=num_classes,
                         dim_model=dim_model,
                         max_token_length=max_token_length,
                         n_layers=n_layers,
                         n_heads=n_heads,
                         ffn_dim=ffn_dim)

    seq = jax.random.randint(k_seq, (B, S), 0, num_classes, dtype=jnp.int32)

    out = categorical_aggregated_transformer_forward(params, seq)
    logits = jax.block_until_ready(out['logits'])
    assert logits.shape == (B, S, num_classes)
    assert bool(jnp.all(jnp.isfinite(logits)))
    print("KERNEL_OK")
</pallas_src>

<mosaic_0001>
module attributes {stable_mosaic.version = 11 : i64} {
  func.func @_enc_kernel(%arg0: i32, %arg1: i32, %arg2: memref<1x4x160xf32, #tpu.memory_space<vmem>>, %arg3: memref<160x32xf32, #tpu.memory_space<vmem>>, %arg4: memref<1x32xf32, #tpu.memory_space<vmem>>, %arg5: memref<4x32xf32, #tpu.memory_space<vmem>>, %arg6: memref<1x4x32xf32, #tpu.memory_space<vmem>>) attributes {dimension_semantics = [#tpu.dimension_semantics<parallel>, #tpu.dimension_semantics<parallel>], iteration_bounds = array<i64: 2, 1>, scalar_prefetch = 0 : i64, scratch_operands = 0 : i64, tpu.core_type = #tpu.core_type<tc>, window_params = [{transform_indices = @transform_0, window_bounds = array<i64: 1, 4, 160>}, {pipeline_mode = #tpu.pipeline_mode<synchronous>, transform_indices = @transform_1, window_bounds = array<i64: 160, 32>}, {pipeline_mode = #tpu.pipeline_mode<synchronous>, transform_indices = @transform_2, window_bounds = array<i64: 1, 32>}, {transform_indices = @transform_3, window_bounds = array<i64: 4, 32>}, {transform_indices = @transform_4, window_bounds = array<i64: 1, 4, 32>}]} {
    %c0 = arith.constant 0 : index
    %c0_0 = arith.constant 0 : index
    %c0_1 = arith.constant 0 : index
    %0 = vector.load %arg2[%c0, %c0_0, %c0_1] : memref<1x4x160xf32, #tpu.memory_space<vmem>>, vector<1x4x160xf32>
    %1 = vector.shape_cast %0 : vector<1x4x160xf32> to vector<4x160xf32>
    %c0_2 = arith.constant 0 : index
    %c0_3 = arith.constant 0 : index
    %2 = vector.load %arg3[%c0_2, %c0_3] : memref<160x32xf32, #tpu.memory_space<vmem>>, vector<160x32xf32>
    %cst = arith.constant dense<0.000000e+00> : vector<4x32xf32>
    %3 = tpu.matmul %1, %2, %cst {dimension_numbers = #tpu.dot_dimension_numbers<[1], [0], [0], [1], [0, 0, 1, 1], [], []>} : vector<4x160xf32>, vector<160x32xf32>, vector<4x32xf32> -> vector<4x32xf32>
    %c0_4 = arith.constant 0 : index
    %c0_5 = arith.constant 0 : index
    %4 = vector.load %arg4[%c0_4, %c0_5] : memref<1x32xf32, #tpu.memory_space<vmem>>, vector<1x32xf32>
    %5 = vector.broadcast %4 : vector<1x32xf32> to vector<4x32xf32>
    %6 = arith.addf %3, %5 : vector<4x32xf32>
    %cst_6 = arith.constant 0.000000e+00 : f32
    %7 = vector.broadcast %cst_6 : f32 to vector<4x32xf32>
    %8 = arith.maximumf %6, %7 : vector<4x32xf32>
    %c0_7 = arith.constant 0 : index
    %c0_8 = arith.constant 0 : index
    %9 = vector.load %arg5[%c0_7, %c0_8] : memref<4x32xf32, #tpu.memory_space<vmem>>, vector<4x32xf32>
    %10 = arith.addf %8, %9 : vector<4x32xf32>
    %c0_9 = arith.constant 0 : index
    %c0_10 = arith.constant 0 : index
    %c0_11 = arith.constant 0 : index
    %11 = vector.load %arg6[%c0_9, %c0_10, %c0_11] : memref<1x4x32xf32, #tpu.memory_space<vmem>>, vector<1x4x32xf32>
    %12 = vector.shape_cast %11 : vector<1x4x32xf32> to vector<4x32xf32>
    %13 = vector.shape_cast %10 : vector<4x32xf32> to vector<1x4x32xf32>
    tpu.vector_store %arg6[%c0_9, %c0_10, %c0_11], %13 {strides = array<i32>} : memref<1x4x32xf32, #tpu.memory_space<vmem>>, vector<1x4x32xf32>,
    return
  }
  func.func @transform_0(%arg0: i32, %arg1: i32) -> (i32, i32, i32) {
    %c0_i32 = arith.constant 0 : i32
    %c0_i32_0 = arith.constant 0 : i32
    return %arg0, %arg1, %c0_i32 : i32, i32, i32
  }
  func.func @transform_1(%arg0: i32, %arg1: i32) -> (i32, i32) {
    %c0_i32 = arith.constant 0 : i32
    %c0_i32_0 = arith.constant 0 : i32
    %c0_i32_1 = arith.constant 0 : i32
    return %c0_i32, %c0_i32_0 : i32, i32
  }
  func.func @transform_2(%arg0: i32, %arg1: i32) -> (i32, i32) {
    %c0_i32 = arith.constant 0 : i32
    %c0_i32_0 = arith.constant 0 : i32
    %c0_i32_1 = arith.constant 0 : i32
    return %c0_i32, %c0_i32_0 : i32, i32
  }
  func.func @transform_3(%arg0: i32, %arg1: i32) -> (i32, i32) {
    %c0_i32 = arith.constant 0 : i32
    %c0_i32_0 = arith.constant 0 : i32
    return %arg1, %c0_i32 : i32, i32
  }
  func.func @transform_4(%arg0: i32, %arg1: i32) -> (i32, i32, i32) {
    %c0_i32 = arith.constant 0 : i32
    %c0_i32_0 = arith.constant 0 : i32
    return %arg0, %arg1, %c0_i32 : i32, i32, i32
  }
}

</mosaic_0001>

<llo_original>
// kernel: tpu_custom_call.1
$region0: #{tpu_custom_call.1}
  #allocation0 [shape = 'u32[]', space=smem, size = 0x4, offset = 0x4, fixed_abs, tag = 'smem constant byte address 0x4 - core index']
  #allocation1 [shape = 'u32[144,128]{1,0:T(1,128)}', space=vmem, size = 0x12000, scoped, tag = 'internal scratch']
  %s0 = inlined_call_operand.vmem [shape: f32[2,4,160], index: 0, kind: input, shape index: {}]
  %s1 = inlined_call_operand.vmem [shape: f32[160,32], index: 1, kind: input, shape index: {}]
  %s2 = inlined_call_operand.vmem [shape: f32[1,32], index: 2, kind: input, shape index: {}]
  %s3 = inlined_call_operand.vmem [shape: f32[4,32], index: 3, kind: input, shape index: {}]
  %s4 = inlined_call_operand.hbm [shape: f32[2,4,32], index: 4, kind: output, shape index: {}]
  %s5 = sld [smem:[#allocation0]]
  $region49: #{tpu_custom_call.1} parent=0
    _
  %s7 = ssub.s32 1, %s5
  %s8 = scalar_select 0, %s7, %s5
  $region1: #{tpu_custom_call.1} parent=0
    #allocation2 [shape = 'u8[4096]{0}', space=vmem, size = 0x1000, scoped, tag = 'output window, operand 0']
    #allocation3 [shape = 's32[2]{0}', space=sflag, size = 0x8, scoped, tag = 'scoped memory for tpu_custom_call.1']
    %9 = vsyncpa [#allocation3], 0
    %s10 = scalar_lea.sflag [#allocation3], 1
    %11 = vsyncpa %s10, 0
    loop: start=0, step=1, limit=4
    $region2: #{tpu_custom_call.1} parent=1 // loop_pre_header
      _
    $region3: #{tpu_custom_call.1} parent=1 // loop_header
      %s13 = sphi 0, %s17
      %p14 = scmp.ge.s32.totalorder %s13, 4
      %s20 = sphi 0, %s32
      %s21 = sphi 0, %s28
      %s22 = sphi 0, %s20
      %s23 = sphi 0, %s21
      %s24 = sphi 0, %s22
      %s25 = sphi 0, %s23
      %s37 = sphi 0, %s39
      %s40 = sphi 0, %s37
      %s41 = sphi 0, %s40
      %s57 = sphi 0, %s41
      %s61 = sphi 0, %s61
      %s63 = sphi 0, %s61
      %s64 = sphi 0, %s63
      %s78 = sphi 0, %s64
      %s82 = sphi 0, %s82
      %s84 = sphi 0, %s82
      %s85 = sphi 0, %s84
      %s99 = sphi 0, %s85
      %s105 = sphi 0, %s107
      %s108 = sphi 0, %s105
      %s109 = sphi 0, %s108
      %s125 = sphi 0, %s109
      %s133 = sphi 0, %s135
      %s136 = sphi 0, %s133
      %s137 = sphi 0, %s136
      %s153 = sphi 0, %s137
    $region4: #{tpu_custom_call.1} parent=1 // loop_header_branch
      %16 = sbr.rel (%p14) target = $region8
    $region5: #{tpu_custom_call.1} parent=1 // loop_body
      %s18 = ssub.s32 %s13, 1
      %s19 = ssub.s32 %s13, 2
      %s26 = sadd.s32 1, %s21
      %p27 = scmp.ge.s32.totalorder %s26, 1
      %s28 = scalar_select %p27, 0, %s26
      %s29 = sadd.s32 1, %s20
      %s30 = scalar_select %p27, %s29, %s20
      %p31 = scmp.ge.s32.totalorder %s30, 2
      %s32 = scalar_select %p31, 0, %s30
      %s33 = ssub.s32 %s20, %s32
      %s34 = ssub.s32 %s21, %s28
      %s35 = sor.u32 %s33, %s34
      %p36 = scmp.eq.s32.totalorder %s35, 0
      %s38 = sadd.s32 %s37, 1
      %s39 = scalar_select %p36, %s37, %s38
      %p42 = pneg %p36
      %p43 = scmp.eq.s32.totalorder %s13, 1
      %p44 = por %p42, %p43
      %p45 = scmp.ne.s32.totalorder %s37, %s40
      %p46 = scmp.eq.s32.totalorder %s13, 0
      %p47 = por %p45, %p46
      %p48 = scmp.ne.s32.totalorder %s37, %s40
      %p49 = scmp.eq.s32.totalorder %s18, 1
      %p50 = por %p48, %p49
      %p51 = scmp.ne.s32.totalorder %s40, %s41
      %p52 = scmp.eq.s32.totalorder %s18, 0
      %p53 = por %p51, %p52
      %p54 = scmp.ne.s32.totalorder %s40, %s41
      %p55 = scmp.eq.s32.totalorder %s19, 1
      %p56 = por %p54, %p55
      %p58 = scmp.ne.s32.totalorder %s41, %s57
      %p59 = scmp.eq.s32.totalorder %s19, 0
      %p60 = por %p58, %p59
      %s62 = sadd.s32 %s61, 1
      %p65 = scmp.eq.s32.totalorder %s13, 1
      %p66 = scmp.ne.s32.totalorder %s61, %s63
      %p67 = scmp.eq.s32.totalorder %s13, 0
      %p68 = por %p66, %p67
      %p69 = scmp.ne.s32.totalorder %s61, %s63
      %p70 = scmp.eq.s32.totalorder %s18, 1
      %p71 = por %p69, %p70
      %p72 = scmp.ne.s32.totalorder %s63, %s64
      %p73 = scmp.eq.s32.totalorder %s18, 0
      %p74 = por %p72, %p73
      %p75 = scmp.ne.s32.totalorder %s63, %s64
      %p76 = scmp.eq.s32.totalorder %s19, 1
      %p77 = por %p75, %p76
      %p79 = scmp.ne.s32.totalorder %s64, %s78
      %p80 = scmp.eq.s32.totalorder %s19, 0
      %p81 = por %p79, %p80
      %s83 = sadd.s32 %s82, 1
      %p86 = scmp.eq.s32.totalorder %s13, 1
      %p87 = scmp.ne.s32.totalorder %s82, %s84
      %p88 = scmp.eq.s32.totalorder %s13, 0
      %p89 = por %p87, %p88
      %p90 = scmp.ne.s32.totalorder %s82, %s84
      %p91 = scmp.eq.s32.totalorder %s18, 1
      %p92 = por %p90, %p91
      %p93 = scmp.ne.s32.totalorder %s84, %s85
      %p94 = scmp.eq.s32.totalorder %s18, 0
      %p95 = por %p93, %p94
      %p96 = scmp.ne.s32.totalorder %s84, %s85
      %p97 = scmp.eq.s32.totalorder %s19, 1
      %p98 = por %p96, %p97
      %p100 = scmp.ne.s32.totalorder %s85, %s99
      %p101 = scmp.eq.s32.totalorder %s19, 0
      %p102 = por %p100, %p101
      %s103 = ssub.s32 %s21, %s28
      %p104 = scmp.eq.s32.totalorder %s103, 0
      %s106 = sadd.s32 %s105, 1
      %s107 = scalar_select %p104, %s105, %s106
      %p110 = pneg %p104
      %p111 = scmp.eq.s32.totalorder %s13, 1
      %p112 = por %p110, %p111
      %p113 = scmp.ne.s32.totalorder %s105, %s108
      %p114 = scmp.eq.s32.totalorder %s13, 0
      %p115 = por %p113, %p114
      %p116 = scmp.ne.s32.totalorder %s105, %s108
      %p117 = scmp.eq.s32.totalorder %s18, 1
      %p118 = por %p116, %p117
      %p119 = scmp.ne.s32.totalorder %s108, %s109
      %p120 = scmp.eq.s32.totalorder %s18, 0
      %p121 = por %p119, %p120
      %p122 = scmp.ne.s32.totalorder %s108, %s109
      %p123 = scmp.eq.s32.totalorder %s19, 1
      %p124 = por %p122, %p123
      %p126 = scmp.ne.s32.totalorder %s109, %s125
      %p127 = scmp.eq.s32.totalorder %s19, 0
      %p128 = por %p126, %p127
      %s129 = ssub.s32 %s20, %s32
      %s130 = ssub.s32 %s21, %s28
      %s131 = sor.u32 %s129, %s130
      %p132 = scmp.eq.s32.totalorder %s131, 0
      %s134 = sadd.s32 %s133, 1
      %s135 = scalar_select %p132, %s133, %s134
      %p138 = pneg %p132
      %p139 = scmp.eq.s32.totalorder %s13, 1
      %p140 = por %p138, %p139
      %p141 = scmp.ne.s32.totalorder %s133, %s136
      %p142 = scmp.eq.s32.totalorder %s13, 0
      %p143 = por %p141, %p142
      %p144 = scmp.ne.s32.totalorder %s133, %s136
      %p145 = scmp.eq.s32.totalorder %s18, 1
      %p146 = por %p144, %p145
      %p147 = scmp.ne.s32.totalorder %s136, %s137
      %p148 = scmp.eq.s32.totalorder %s18, 0
      %p149 = por %p147, %p148
      %p150 = scmp.ne.s32.totalorder %s136, %s137
      %p151 = scmp.eq.s32.totalorder %s19, 1
      %p152 = por %p150, %p151
      %p154 = scmp.ne.s32.totalorder %s137, %s153
      %p155 = scmp.eq.s32.totalorder %s19, 0
      %p156 = por %p154, %p155
      %p157 = scmp.le.s32.totalorder 1, %s13
      %p158 = scmp.lt.s32.totalorder %s13, 3
      %p159 = pnand %p157, %p158
      %p160 = pneg %p159
      // Predicated region
      $region9: #{tpu_custom_call.1} parent=5 // pred_check
        _
      $region10: #{tpu_custom_call.1} parent=5 // pred_check_branch
        %162 = sbr.rel (%p159) target = $region12
      $region11: #{tpu_custom_call.1} parent=5 // pred_region
        %s163 = ssub.s32 %s13, 1
        // Predicated region
        $region13: #{tpu_custom_call.1} parent=11 // pred_check
          %p164 = pneg %p74
        $region14: #{tpu_custom_call.1} parent=11 // pred_check_branch
          %166 = sbr.rel (%p164) target = $region16
        $region15: #{tpu_custom_call.1} parent=11 // pred_region
          _
        $region16: #{tpu_custom_call.1} parent=11 // pred_fallthru
          _
        // Predicated region
        $region17: #{tpu_custom_call.1} parent=11 // pred_check
          %p167 = pneg %p95
        $region18: #{tpu_custom_call.1} parent=11 // pred_check_branch
          %169 = sbr.rel (%p167) target = $region20
        $region19: #{tpu_custom_call.1} parent=11 // pred_region
          _
        $region20: #{tpu_custom_call.1} parent=11 // pred_fallthru
          _
        // Predicated region
        $region21: #{tpu_custom_call.1} parent=11 // pred_check
          %p170 = pneg %p121
        $region22: #{tpu_custom_call.1} parent=11 // pred_check_branch
          %172 = sbr.rel (%p170) target = $region24
        $region23: #{tpu_custom_call.1} parent=11 // pred_region
          %p173 = scmp.lt.s32.totalorder %s23, 0
          %s174 = scalar_select %p173, %s23, 0
          %s175 = smul.addr %s174, 4
          %s176 = scalar_lea.vmem %s3, %s175
        $region24: #{tpu_custom_call.1} parent=11 // pred_fallthru
          _
      $region12: #{tpu_custom_call.1} parent=5 // pred_fallthru
        _
      %p177 = scmp.lt.s32.totalorder %s13, 2
      // Predicated region
      $region25: #{tpu_custom_call.1} parent=5 // pred_check
        %p178 = pneg %p177
      $region26: #{tpu_custom_call.1} parent=5 // pred_check_branch
        %180 = sbr.rel (%p178) target = $region28
      $region27: #{tpu_custom_call.1} parent=5 // pred_region
        // Predicated region
        $region29: #{tpu_custom_call.1} parent=27 // pred_check
          %p181 = pneg %p47
        $region30: #{tpu_custom_call.1} parent=27 // pred_check_branch
          %183 = sbr.rel (%p181) target = $region32
        $region31: #{tpu_custom_call.1} parent=27 // pred_region
          %p184 = scmp.lt.s32.totalorder %s20, 1
          %s185 = scalar_select %p184, %s20, 1
          %p186 = scmp.lt.s32.totalorder %s21, 0
          %s187 = scalar_select %p186, %s21, 0
          %s188 = smul.addr %s187, 2
          %s189 = smul.addr %s185, 2
          %s190 = sadd.s32 %s188, %s189
          %s191 = smul.addr %s190, 4
          %s192 = scalar_lea.vmem %s0, %s191
        $region32: #{tpu_custom_call.1} parent=27 // pred_fallthru
          _
      $region28: #{tpu_custom_call.1} parent=5 // pred_fallthru
        _
      %p193 = scmp.le.s32.totalorder 1, %s13
      %p194 = scmp.lt.s32.totalorder %s13, 3
      %p195 = pnand %p193, %p194
      %p196 = pneg %p195
      // Predicated region
      $region33: #{tpu_custom_call.1} parent=5 // pred_check
        _
      $region34: #{tpu_custom_call.1} parent=5 // pred_check_branch
        %198 = sbr.rel (%p195) target = $region36
      $region35: #{tpu_custom_call.1} parent=5 // pred_region
        %s199 = ssub.s32 %s13, 1
        %p200 = scmp.lt.s32.totalorder %s22, 1
        %s201 = scalar_select %p200, %s22, 1
        %p202 = scmp.lt.s32.totalorder %s23, 0
        %s203 = scalar_select %p202, %s23, 0
        %s204 = smul.addr %s203, 2
        %s205 = smul.addr %s201, 2
        %s206 = sadd.s32 %s204, %s205
        %s207 = smul.addr %s206, 4
        %s208 = scalar_lea.vmem %s0, %s207
        %p209 = pneg %p53
        %p210 = pneg %p50
        %p211 = pneg %p74
        %p212 = pneg %p71
        %p213 = pneg %p95
        %p214 = pneg %p92
        %p215 = scmp.lt.s32.totalorder %s23, 0
        %s216 = scalar_select %p215, %s23, 0
        %s217 = smul.addr %s216, 4
        %s218 = scalar_lea.vmem %s3, %s217
        %p219 = pneg %p121
        %p220 = pneg %p118
        %p221 = pneg %p149
        %p222 = pneg %p146
        %s223 = sand.u32 %s136, 1
        %s224 = scalar_lea.sflag [#allocation3], %s223
        %s225 = sand.u32 %s136, 1
        %s226 = smul.addr %s225, 4
        %s227 = scalar_lea.vmem [#allocation2], %s226
        %p228 = scmp.lt.s32.totalorder %s22, 1
        %s229 = scalar_select %p228, %s22, 1
        %p230 = scmp.lt.s32.totalorder %s23, 0
        %s231 = scalar_select %p230, %s23, 0
        %s232 = smul.addr %s231, 2
        %s233 = smul.addr %s229, 2
        %s234 = sadd.s32 %s232, %s233
        %s235 = smul.addr %s234, 4
        %s236 = scalar_lea.vmem %s0, %s235
        %p237 = scmp.lt.s32.totalorder %s23, 0
        %s238 = scalar_select %p237, %s23, 0
        %s239 = smul.addr %s238, 4
        %s240 = scalar_lea.vmem %s3, %s239
        %v241 = vld [vmem:[%s236] sm:$0xff]
        %v242 = vld [vmem:[%s1] sm:$0xff]
        %v243 = vld [vmem:[%s1 + $0x8] sm:$0xff]
        %v244 = vld [vmem:[%s1 + $0x10] sm:$0xff]
        %v245 = vld [vmem:[%s1 + $0x18] sm:$0xff]
        %v246 = vld [vmem:[%s1 + $0x20] sm:$0xff]
        %v247 = vld [vmem:[%s1 + $0x28] sm:$0xff]
        %v248 = vld [vmem:[%s1 + $0x30] sm:$0xff]
        %v249 = vld [vmem:[%s1 + $0x38] sm:$0xff]
        %v250 = vld [vmem:[%s1 + $0x40] sm:$0xff]
        %v251 = vld [vmem:[%s1 + $0x48] sm:$0xff]
        %v252 = vld [vmem:[%s1 + $0x50] sm:$0xff]
        %v253 = vld [vmem:[%s1 + $0x58] sm:$0xff]
        %v254 = vld [vmem:[%s1 + $0x60] sm:$0xff]
        %v255 = vld [vmem:[%s1 + $0x68] sm:$0xff]
        %v256 = vld [vmem:[%s1 + $0x70] sm:$0xff]
        %v257 = vld [vmem:[%s1 + $0x78] sm:$0xff]
        %v258 = vld [vmem:[%s1 + $0x80] sm:$0xff]
        %v259 = vld [vmem:[%s1 + $0x88] sm:$0xff]
        %v260 = vld [vmem:[%s1 + $0x90] sm:$0xff]
        %v261 = vld [vmem:[%s1 + $0x98] sm:$0xff]
        %v262 = vld [vmem:[%s2] sm:$0x1]
        %v264 = vlaneseq
        %v265 = vshrl.u32 %v264, 7
        %v266 = vsub.s32 0, %v265
        %v267 = vrot.slane %v262, %v266
        %v270 = vcombine.high %v241, %v241
        %vm271 = vcmask 261120
        %v272 = vsel %vm271, %v270, 0
        %274 = vmatprep.subr.mxu0 0.0
        %275 = vmatpush1.msra.mxu0 %v242
        %276 = vmatprep.subr.mxu0 0.0
        %277 = vmatpush1.msra.mxu0 %v243
        %278 = vmatprep.subr.mxu0 0.0
        %279 = vmatpush1.msra.mxu0 %v244
        %280 = vmatprep.subr.mxu0 0.0
        %281 = vmatpush1.msra.mxu0 %v245
        %282 = vmatprep.subr.mxu0 0.0
        %283 = vmatpush1.msra.mxu0 %v246
        %284 = vmatprep.subr.mxu0 0.0
        %285 = vmatpush1.msra.mxu0 %v247
        %286 = vmatprep.subr.mxu0 0.0
        %287 = vmatpush1.msra.mxu0 %v248
        %288 = vmatprep.subr.mxu0 0.0
        %289 = vmatpush1.msra.mxu0 %v249
        %290 = vmatprep.subr.mxu0 0.0
        %291 = vmatpush1.msra.mxu0 %v250
        %292 = vmatprep.subr.mxu0 0.0
        %293 = vmatpush1.msra.mxu0 %v251
        %294 = vmatprep.subr.mxu0 0.0
        %295 = vmatpush1.msra.mxu0 %v252
        %296 = vmatprep.subr.mxu0 0.0
        %297 = vmatpush1.msra.mxu0 %v253
        %298 = vmatprep.subr.mxu0 0.0
        %299 = vmatpush1.msra.mxu0 %v254
        %300 = vmatprep.subr.mxu0 0.0
        %301 = vmatpush1.msra.mxu0 %v255
        %302 = vmatprep.subr.mxu0 0.0
        %303 = vmatpush1.msra.mxu0 %v256
        %304 = vmatprep.subr.mxu0 0.0
        %305 = vmatpush1.msra.mxu0 %v257
        %306 = vmatprep.subr.mxu0 0.0
        %307 = vmatpush1.msra.mxu0 %v258
        %308 = vmatprep.subr.mxu0 0.0
        %309 = vmatpush1.msra.mxu0 %v259
        %310 = vmatprep.subr.mxu0 0.0
        %311 = vmatpush1.msra.mxu0 %v260
        %312 = vmatprep.subr.mxu0 0.0
        %313 = vmatpush1.msra.mxu0 %v261
        %314 = vmatprep.subr.mxu0 0.0
        %315 = vmatpush1.msra.mxu0 0.0
        %316 = vmatprep.subr.mxu0 0.0
        %317 = vmatpush1.msra.mxu0 0.0
        %318 = vmatprep.subr.mxu0 0.0
        %319 = vmatpush1.msra.mxu0 0.0
        %320 = vmatprep.subr.mxu0 0.0
        %321 = vmatpush1.msra.mxu0 0.0
        %322 = vmatprep.subr.mxu0 0.0
        %323 = vmatpush1.msra.mxu0 0.0
        %324 = vmatprep.subr.mxu0 0.0
        %325 = vmatpush1.msra.mxu0 0.0
        %326 = vmatprep.subr.mxu0 0.0
        %327 = vmatpush1.msra.mxu0 0.0
        %328 = vmatprep.subr.mxu0 0.0
        %329 = vmatpush1.msra.mxu0 0.0
        %330 = vmatprep.subr.mxu0 0.0
        %331 = vmatpush1.msra.mxu0 0.0
        %332 = vmatprep.subr.mxu0 0.0
        %333 = vmatpush1.msra.mxu0 0.0
        %334 = vmatprep.subr.mxu0 0.0
        %335 = vmatpush1.msra.mxu0 0.0
        %336 = vmatprep.subr.mxu0 0.0
        %337 = vmatpush1.msra.mxu0 0.0
        %338 = vmatprep.mubr.f32.mxu0 %v272
        %339 = vmatmul.mubr.f32.gmra.mrb[0].mxu0 %v241
        %v340 = vpop.f32.mrb[0].mxu0
        %v341 = vadd.f32 %v267, %v340
        %v342 = vpop.f32.mrb[0].mxu0
        %343 = vdwg.mxu0
        %v344 = vmax.f32 %v341, 0.0
        %v345 = vld [vmem:[%s240] sm:$0xf]
        %v346 = vadd.f32 %v344, %v345
        %vm347 = vcmask 257024
        %348 = vst.msk [vmem:[%s227] sm:$0xf] %vm347, %v346
        %s349 = sand.u32 %s136, 1
        %s350 = scalar_lea.sflag [#allocation3], %s349
        %s351 = sand.u32 %s136, 1
        %s352 = smul.addr %s351, 4
        %s353 = scalar_lea.vmem [#allocation2], %s352
        // Predicated region
        $region37: #{tpu_custom_call.1} parent=35 // pred_check
          %p354 = pneg %p146
        $region38: #{tpu_custom_call.1} parent=35 // pred_check_branch
          %356 = sbr.rel (%p354) target = $region40
        $region39: #{tpu_custom_call.1} parent=35 // pred_region
          %s358 = ssub.s32 64, 64
          %359 = vsyncadd %s350, %s358
          %s360 = sadd.s32 %s23, %s22
          %s361 = smul.addr %s360, 64
          %s362 = scalar_lea.hbm %s4, %s361
          %s364 = sshll.u32 %s353, 4
          %s365 = int_to_ptr.vmem [resolvable:$true] %s364
          %367 = dma.vmem_to_hbm [thread:$0]  %s365, 64, %s362, %s350
        $region40: #{tpu_custom_call.1} parent=35 // pred_fallthru
          _
      $region36: #{tpu_custom_call.1} parent=5 // pred_fallthru
        _
      %p368 = scmp.le.s32.totalorder 2, %s13
      // Predicated region
      $region41: #{tpu_custom_call.1} parent=5 // pred_check
        %p369 = pneg %p368
      $region42: #{tpu_custom_call.1} parent=5 // pred_check_branch
        %371 = sbr.rel (%p369) target = $region44
      $region43: #{tpu_custom_call.1} parent=5 // pred_region
        %s372 = ssub.s32 %s13, 2
        // Predicated region
        $region45: #{tpu_custom_call.1} parent=43 // pred_check
          %p373 = pneg %p152
        $region46: #{tpu_custom_call.1} parent=43 // pred_check_branch
          %375 = sbr.rel (%p373) target = $region48
        $region47: #{tpu_custom_call.1} parent=43 // pred_region
          %s376 = sand.u32 %s137, 1
          %s377 = scalar_lea.sflag [#allocation3], %s376
          %s378 = sand.u32 %s137, 1
          %s379 = smul.addr %s378, 4
          %s380 = scalar_lea.vmem [#allocation2], %s379
          %381 = dma.done %s377, 64
        $region48: #{tpu_custom_call.1} parent=43 // pred_fallthru
          _
      $region44: #{tpu_custom_call.1} parent=5 // pred_fallthru
        _
    $region6: #{tpu_custom_call.1} parent=1 // loop_footer
      %s17 = sadd.s32 1, %s13
    $region7: #{tpu_custom_call.1} parent=1 // loop_footer_branch
      %12 = sbr.rel target = $region3
    $region8: #{tpu_custom_call.1} parent=1 // loop_exit
      _
    %382 = vsyncpa [#allocation3], 1
    %s383 = scalar_lea.sflag [#allocation3], 1
    %384 = vsyncpa %s383, 1

</llo_original>
